<compile_context>
chip_gen: v7x
topology: tpu7x:2x2x1
jax: 0.10.0
libtpu: 0.0.40
codegen_flags: <defaults>
</compile_context>

<pallas_src>
import functools

import jax
import jax.numpy as jnp
from jax import lax
from jax.experimental import pallas as pl
from jax.experimental.pallas import tpu as pltpu

_LANES = 128
_MAX_HW_BLOCK = 256 * _LANES                 # 32768-elem lane-dense spatial tile
_TARGET_BLOCK_ELEMS = 16 * _MAX_HW_BLOCK     # ~2 MiB f32 per input per buffer


def _combo_kernel(o_ref, t_ref, bce_ref, inter_ref, union_ref, *,
                  hw: int, hw_blk: int, n_outer: int, n_inner: int):
    """One (channel/outer-spatial tile, inner-spatial tile) step of the fused reduction."""
    g = pl.program_id(0)   # composite (channel-tile, outer-spatial) index — 'parallel'
    j = pl.program_id(1)   # inner spatial tile index — 'arbitrary' reduction axis

    @pl.when(j == 0)
    def _():
        bce_ref[...] = jnp.zeros_like(bce_ref)
        inter_ref[...] = jnp.zeros_like(inter_ref)
        union_ref[...] = jnp.zeros_like(union_ref)

    o = o_ref[...].astype(jnp.float32)
    t = t_ref[...].astype(jnp.float32)

    # torch.nn.BCELoss elementwise term WITHOUT the leading minus sign (applied
    # in the wrapper):  t*log(o) + (1-t)*log(1-o) == log(1-o) + t*(log(o)-log(1-o)).
    # Log terms clamped at -100, exactly like torch.
    log_o = jnp.maximum(jnp.log(o), -100.0)
    log_1mo = jnp.maximum(jnp.log1p(-o), -100.0)
    bce_elem = log_1mo + t * (log_o - log_1mo)

    # Dice (soft=False): hard-round the prediction.
    o_r = jnp.round(o)
    inter_elem = o_r * t
    union_elem = o_r + t

    def _accum(b, i_, u):
        bce_ref[...] += jnp.sum(b, axis=1, keepdims=True)
        inter_ref[...] += jnp.sum(i_, axis=1, keepdims=True)
        union_ref[...] += jnp.sum(u, axis=1, keepdims=True)

    if (hw % hw_blk) != 0:
        # Only the LAST spatial tile is ragged: pay the mask there only.
        if n_outer > 1:
            is_last = ((g % n_outer) == n_outer - 1) & (j == n_inner - 1)
        else:
            is_last = j == n_inner - 1
        n_sp = n_outer * n_inner
        cols_valid = hw - (n_sp - 1) * hw_blk   # static: valid columns of the last tile

        @pl.when(is_last)
        def _():
            valid = lax.broadcasted_iota(jnp.int32, o.shape, 1) < cols_valid
            zero = jnp.float32(0.0)
            _accum(jnp.where(valid, bce_elem, zero),
                   jnp.where(valid, inter_elem, zero),
                   jnp.where(valid, union_elem, zero))

        @pl.when(jnp.logical_not(is_last))
        def _():
            _accum(bce_elem, inter_elem, union_elem)
    else:
        _accum(bce_elem, inter_elem, union_elem)


def combo_loss(output: jax.Array, target: jax.Array, *, smooth: float = 1e-7) -> jax.Array:
    """BCELoss(mean) + DiceLoss(soft=False, smooth=1e-7, reduce=mean) on NCHW inputs."""
    assert output.shape == target.shape and output.ndim == 4
    B, C, H, W = output.shape
    BC, HW = B * C, H * W
    total_n = output.size

    o2d = output.reshape(BC, HW)
    t2d = target.reshape(BC, HW)

    # Sublane multiple for the narrowest streamed dtype (f32->8, bf16->16, int8->32);
    # inputs are streamed in their own dtype and upcast to f32 in VMEM.
    min_itemsize = min(o2d.dtype.itemsize, t2d.dtype.itemsize)
    sub = max(8, 32 // int(min_itemsize))

    # Spatial tile: full H*W if it fits, else a lane-dense 32768-elem tile (tail masked).
    # TODO(synk): H*W < 128 leaves the vreg lane-sparse; packing k channel rows per
    # lane row with a segmented in-block reduce would restore lane utilization.
    hw_blk = HW if HW <= _MAX_HW_BLOCK else _MAX_HW_BLOCK

    # Channel tile: sublane-multiple sized for ~2 MiB(f32) per input per buffer.
    if BC <= sub:
        bc_blk = BC
    else:
        want = max(sub, (_TARGET_BLOCK_ELEMS // hw_blk) // sub * sub)
        bc_blk = min(want, (BC // sub) * sub)

    grid_bc = pl.cdiv(BC, bc_blk)
    n_sp = pl.cdiv(HW, hw_blk)

    # Megacore fix: if the channel-parallel axis degenerates to one tile, split the
    # spatial tiles into an outer 'parallel' factor of 2 (only when it divides evenly)
    # so both TensorCores (v7x) get work; per-outer partials are summed in the epilogue.
    if grid_bc == 1 and n_sp >= 2 and n_sp % 2 == 0:
        n_outer = 2
    else:
        n_outer = 1
    n_inner = n_sp // n_outer

    grid = (grid_bc * n_outer, n_inner)
    bc_pad = grid_bc * bc_blk

    if n_outer == 1:
        in_map = lambda i, j: (i, j)
        out_map = lambda i, j: (0, i, 0)
    else:
        in_map = lambda g, j: (g // n_outer, (g % n_outer) * n_inner + j)
        out_map = lambda g, j: (g % n_outer, g // n_outer, 0)

    in_spec = pl.BlockSpec((bc_blk, hw_blk), in_map)
    out_spec = pl.BlockSpec((None, bc_blk, 1), out_map)   # resident across j (reduction)
    out_sds = jax.ShapeDtypeStruct((n_outer, bc_pad, 1), jnp.float32)

    kernel = functools.partial(_combo_kernel, hw=HW, hw_blk=hw_blk,
                               n_outer=n_outer, n_inner=n_inner)

    in_bytes = o2d.size * o2d.dtype.itemsize + t2d.size * t2d.dtype.itemsize
    out_bytes = 3 * n_outer * bc_pad * 4
    cost = pl.CostEstimate(flops=12 * total_n, transcendentals=2 * total_n,
                           bytes_accessed=int(in_bytes) + out_bytes)

    bce_rows, inter_rows, union_rows = pl.pallas_call(
        kernel,
        out_shape=(out_sds, out_sds, out_sds),
        grid_spec=pltpu.PrefetchScalarGridSpec(
            num_scalar_prefetch=0,
            grid=grid,
            in_specs=[in_spec, in_spec],
            out_specs=[out_spec, out_spec, out_spec],
        ),
        compiler_params=pltpu.CompilerParams(
            # composite (channel, outer-spatial) axis is independent (megacore-shardable);
            # inner spatial axis is the accumulating reduction.
            dimension_semantics=("parallel", "arbitrary"),
            vmem_limit_bytes=32 * 1024 * 1024,
        ),
        cost_estimate=cost,
    )(o2d, t2d)

    # Tiny O(B*C) epilogue in plain JAX.  Padded channel rows (>= BC) may hold
    # garbage from out-of-bounds input reads — slice them off BEFORE summing.
    bce_sum = jnp.sum(jnp.sum(bce_rows, axis=0)[:BC])
    bce_mean = -bce_sum / jnp.float32(total_n)        # minus sign moved out of the kernel
    inter = jnp.sum(inter_rows, axis=0)[:BC, 0]
    union = jnp.sum(union_rows, axis=0)[:BC, 0]
    dice = 1.0 - (2.0 * inter + smooth) / (union + smooth)
    return bce_mean + jnp.mean(dice)


def _reference(output, target, smooth=1e-7):
    """Pure-JAX mirror of torch.nn.BCELoss(mean) + DiceLoss(soft=False, mean)."""
    log_o = jnp.maximum(jnp.log(output), -100.0)
    log_1mo = jnp.maximum(jnp.log1p(-output), -100.0)
    bce = jnp.mean(-(target * log_o + (1.0 - target) * log_1mo))
    o_r = jnp.round(output)
    inter = jnp.sum(o_r * target, axis=(2, 3))
    union = jnp.sum(o_r + target, axis=(2, 3))
    dice = jnp.mean(1.0 - (2.0 * inter + smooth) / (union + smooth))
    return bce + dice


if __name__ == "__main__":
    key = jax.random.PRNGKey(0)

    shapes = [
        (2, 4, 16, 16),    # base case: single spatial tile, BC == channel tile
        (3, 4, 16, 16),    # channel tail: BC=12, bc_blk=8 (padded rows sliced in epilogue)
        (1, 1, 200, 200),  # spatial split (n_outer=2) + ragged last spatial tile mask
    ]
    for shape in shapes:
        key, k_out, k_tgt = jax.random.split(key, 3)
        # BCELoss expects probabilities in (0, 1).
        output = jax.nn.sigmoid(jax.random.normal(k_out, shape, dtype=jnp.float32))
        target = jax.random.bernoulli(k_tgt, p=0.5, shape=shape).astype(jnp.float32)

        loss = combo_loss(output, target)
        jax.block_until_ready(loss)
        ref = _reference(output, target)
        assert jnp.allclose(loss, ref, rtol=1e-5, atol=1e-5), (shape, loss, ref)

    print("KERNEL_OK")
</pallas_src>

<mosaic_0001>
module attributes {stable_mosaic.version = 11 : i64} {
  func.func @_combo_kernel(%arg0: i32, %arg1: i32, %arg2: memref<8x256xf32, #tpu.memory_space<vmem>>, %arg3: memref<8x256xf32, #tpu.memory_space<vmem>>, %arg4: memref<1x8x1xf32, #tpu.memory_space<vmem>>, %arg5: memref<1x8x1xf32, #tpu.memory_space<vmem>>, %arg6: memref<1x8x1xf32, #tpu.memory_space<vmem>>) attributes {dimension_semantics = [#tpu.dimension_semantics<parallel>, #tpu.dimension_semantics<arbitrary>], iteration_bounds = array<i64: 1, 1>, scalar_prefetch = 0 : i64, scratch_operands = 0 : i64, tpu.core_type = #tpu.core_type<tc>, window_params = [{transform_indices = @transform_0, window_bounds = array<i64: 8, 256>}, {transform_indices = @transform_1, window_bounds = array<i64: 8, 256>}, {transform_indices = @transform_2, window_bounds = array<i64: 1, 8, 1>}, {transform_indices = @transform_3, window_bounds = array<i64: 1, 8, 1>}, {transform_indices = @transform_4, window_bounds = array<i64: 1, 8, 1>}]} {
    %c0_i32 = arith.constant 0 : i32
    %0 = arith.cmpi eq, %arg1, %c0_i32 : i32
    %1 = arith.extui %0 : i1 to i32
    %c0_i32_0 = arith.constant 0 : i32
    %2 = arith.cmpi ne, %1, %c0_i32_0 : i32
    scf.if %2 {
      %cst_27 = arith.constant 0.000000e+00 : f32
      %43 = vector.broadcast %cst_27 : f32 to vector<8x1xf32>
      %c0_28 = arith.constant 0 : index
      %c0_29 = arith.constant 0 : index
      %c0_30 = arith.constant 0 : index
      %44 = vector.load %arg4[%c0_28, %c0_29, %c0_30] : memref<1x8x1xf32, #tpu.memory_space<vmem>>, vector<1x8x1xf32>
      %45 = vector.shape_cast %44 : vector<1x8x1xf32> to vector<8x1xf32>
      %46 = vector.shape_cast %43 : vector<8x1xf32> to vector<1x8x1xf32>
      tpu.vector_store %arg4[%c0_28, %c0_29, %c0_30], %46 {strides = array<i32>} : memref<1x8x1xf32, #tpu.memory_space<vmem>>, vector<1x8x1xf32>,
      %cst_31 = arith.constant 0.000000e+00 : f32
      %47 = vector.broadcast %cst_31 : f32 to vector<8x1xf32>
      %c0_32 = arith.constant 0 : index
      %c0_33 = arith.constant 0 : index
      %c0_34 = arith.constant 0 : index
      %48 = vector.load %arg5[%c0_32, %c0_33, %c0_34] : memref<1x8x1xf32, #tpu.memory_space<vmem>>, vector<1x8x1xf32>
      %49 = vector.shape_cast %48 : vector<1x8x1xf32> to vector<8x1xf32>
      %50 = vector.shape_cast %47 : vector<8x1xf32> to vector<1x8x1xf32>
      tpu.vector_store %arg5[%c0_32, %c0_33, %c0_34], %50 {strides = array<i32>} : memref<1x8x1xf32, #tpu.memory_space<vmem>>, vector<1x8x1xf32>,
      %cst_35 = arith.constant 0.000000e+00 : f32
      %51 = vector.broadcast %cst_35 : f32 to vector<8x1xf32>
      %c0_36 = arith.constant 0 : index
      %c0_37 = arith.constant 0 : index
      %c0_38 = arith.constant 0 : index
      %52 = vector.load %arg6[%c0_36, %c0_37, %c0_38] : memref<1x8x1xf32, #tpu.memory_space<vmem>>, vector<1x8x1xf32>
      %53 = vector.shape_cast %52 : vector<1x8x1xf32> to vector<8x1xf32>
      %54 = vector.shape_cast %51 : vector<8x1xf32> to vector<1x8x1xf32>
      tpu.vector_store %arg6[%c0_36, %c0_37, %c0_38], %54 {strides = array<i32>} : memref<1x8x1xf32, #tpu.memory_space<vmem>>, vector<1x8x1xf32>,
    } else {
    }
    %c0 = arith.constant 0 : index
    %c0_1 = arith.constant 0 : index
    %3 = vector.load %arg2[%c0, %c0_1] : memref<8x256xf32, #tpu.memory_space<vmem>>, vector<8x256xf32>
    %c0_2 = arith.constant 0 : index
    %c0_3 = arith.constant 0 : index
    %4 = vector.load %arg3[%c0_2, %c0_3] : memref<8x256xf32, #tpu.memory_space<vmem>>, vector<8x256xf32>
    %5 = math.log %3 : vector<8x256xf32>
    %cst = arith.constant -1.000000e+02 : f32
    %6 = vector.broadcast %cst : f32 to vector<8x256xf32>
    %7 = arith.maximumf %5, %6 : vector<8x256xf32>
    %cst_4 = arith.constant 0.000000e+00 : f32
    %8 = vector.broadcast %cst_4 : f32 to vector<8x256xf32>
    %9 = arith.subf %8, %3 : vector<8x256xf32>
    %10 = math.log1p %9 : vector<8x256xf32>
    %cst_5 = arith.constant -1.000000e+02 : f32
    %11 = vector.broadcast %cst_5 : f32 to vector<8x256xf32>
    %12 = arith.maximumf %10, %11 : vector<8x256xf32>
    %13 = arith.subf %7, %12 : vector<8x256xf32>
    %14 = arith.mulf %4, %13 : vector<8x256xf32>
    %15 = arith.addf %12, %14 : vector<8x256xf32>
    %16 = math.roundeven %3 : vector<8x256xf32>
    %17 = arith.mulf %16, %4 : vector<8x256xf32>
    %18 = arith.addf %16, %4 : vector<8x256xf32>
    %c0_6 = arith.constant 0 : index
    %c0_7 = arith.constant 0 : index
    %c0_8 = arith.constant 0 : index
    %19 = vector.load %arg4[%c0_6, %c0_7, %c0_8] : memref<1x8x1xf32, #tpu.memory_space<vmem>>, vector<1x8x1xf32>
    %20 = vector.shape_cast %19 : vector<1x8x1xf32> to vector<8x1xf32>
    %cst_9 = arith.constant dense<0.000000e+00> : vector<8xf32>
    %21 = vector.multi_reduction <add>, %15, %cst_9 [1] : vector<8x256xf32> to vector<8xf32>
    %22 = vector.shape_cast %21 : vector<8xf32> to vector<8x1xf32>
    %23 = arith.addf %20, %22 : vector<8x1xf32>
    %c0_10 = arith.constant 0 : index
    %c0_11 = arith.constant 0 : index
    %c0_12 = arith.constant 0 : index
    %24 = vector.load %arg4[%c0_10, %c0_11, %c0_12] : memref<1x8x1xf32, #tpu.memory_space<vmem>>, vector<1x8x1xf32>
    %25 = vector.shape_cast %24 : vector<1x8x1xf32> to vector<8x1xf32>
    %26 = vector.shape_cast %23 : vector<8x1xf32> to vector<1x8x1xf32>
    tpu.vector_store %arg4[%c0_10, %c0_11, %c0_12], %26 {strides = array<i32>} : memref<1x8x1xf32, #tpu.memory_space<vmem>>, vector<1x8x1xf32>,
    %c0_13 = arith.constant 0 : index
    %c0_14 = arith.constant 0 : index
    %c0_15 = arith.constant 0 : index
    %27 = vector.load %arg5[%c0_13, %c0_14, %c0_15] : memref<1x8x1xf32, #tpu.memory_space<vmem>>, vector<1x8x1xf32>
    %28 = vector.shape_cast %27 : vector<1x8x1xf32> to vector<8x1xf32>
    %cst_16 = arith.constant dense<0.000000e+00> : vector<8xf32>
    %29 = vector.multi_reduction <add>, %17, %cst_16 [1] : vector<8x256xf32> to vector<8xf32>
    %30 = vector.shape_cast %29 : vector<8xf32> to vector<8x1xf32>
    %31 = arith.addf %28, %30 : vector<8x1xf32>
    %c0_17 = arith.constant 0 : index
    %c0_18 = arith.constant 0 : index
    %c0_19 = arith.constant 0 : index
    %32 = vector.load %arg5[%c0_17, %c0_18, %c0_19] : memref<1x8x1xf32, #tpu.memory_space<vmem>>, vector<1x8x1xf32>
    %33 = vector.shape_cast %32 : vector<1x8x1xf32> to vector<8x1xf32>
    %34 = vector.shape_cast %31 : vector<8x1xf32> to vector<1x8x1xf32>
    tpu.vector_store %arg5[%c0_17, %c0_18, %c0_19], %34 {strides = array<i32>} : memref<1x8x1xf32, #tpu.memory_space<vmem>>, vector<1x8x1xf32>,
    %c0_20 = arith.constant 0 : index
    %c0_21 = arith.constant 0 : index
    %c0_22 = arith.constant 0 : index
    %35 = vector.load %arg6[%c0_20, %c0_21, %c0_22] : memref<1x8x1xf32, #tpu.memory_space<vmem>>, vector<1x8x1xf32>
    %36 = vector.shape_cast %35 : vector<1x8x1xf32> to vector<8x1xf32>
    %cst_23 = arith.constant dense<0.000000e+00> : vector<8xf32>
    %37 = vector.multi_reduction <add>, %18, %cst_23 [1] : vector<8x256xf32> to vector<8xf32>
    %38 = vector.shape_cast %37 : vector<8xf32> to vector<8x1xf32>
    %39 = arith.addf %36, %38 : vector<8x1xf32>
    %c0_24 = arith.constant 0 : index
    %c0_25 = arith.constant 0 : index
    %c0_26 = arith.constant 0 : index
    %40 = vector.load %arg6[%c0_24, %c0_25, %c0_26] : memref<1x8x1xf32, #tpu.memory_space<vmem>>, vector<1x8x1xf32>
    %41 = vector.shape_cast %40 : vector<1x8x1xf32> to vector<8x1xf32>
    %42 = vector.shape_cast %39 : vector<8x1xf32> to vector<1x8x1xf32>
    tpu.vector_store %arg6[%c0_24, %c0_25, %c0_26], %42 {strides = array<i32>} : memref<1x8x1xf32, #tpu.memory_space<vmem>>, vector<1x8x1xf32>,
    return
  }
  func.func @transform_0(%arg0: i32, %arg1: i32) -> (i32, i32) {
    %c0_i32 = arith.constant 0 : i32
    return %arg0, %arg1 : i32, i32
  }
  func.func @transform_1(%arg0: i32, %arg1: i32) -> (i32, i32) {
    %c0_i32 = arith.constant 0 : i32
    return %arg0, %arg1 : i32, i32
  }
  func.func @transform_2(%arg0: i32, %arg1: i32) -> (i32, i32, i32) {
    %c0_i32 = arith.constant 0 : i32
    %c0_i32_0 = arith.constant 0 : i32
    %c0_i32_1 = arith.constant 0 : i32
    return %c0_i32, %arg0, %c0_i32_0 : i32, i32, i32
  }
  func.func @transform_3(%arg0: i32, %arg1: i32) -> (i32, i32, i32) {
    %c0_i32 = arith.constant 0 : i32
    %c0_i32_0 = arith.constant 0 : i32
    %c0_i32_1 = arith.constant 0 : i32
    return %c0_i32, %arg0, %c0_i32_0 : i32, i32, i32
  }
  func.func @transform_4(%arg0: i32, %arg1: i32) -> (i32, i32, i32) {
    %c0_i32 = arith.constant 0 : i32
    %c0_i32_0 = arith.constant 0 : i32
    %c0_i32_1 = arith.constant 0 : i32
    return %c0_i32, %arg0, %c0_i32_0 : i32, i32, i32
  }
}

</mosaic_0001>

<llo_original>
// kernel: tpu_custom_call.1
$region0: #{tpu_custom_call.1}
  #allocation0 [shape = 'u32[]', space=smem, size = 0x4, offset = 0x4, fixed_abs, tag = 'smem constant byte address 0x4 - core index']
  #allocation1 [shape = 'u32[144,128]{1,0:T(1,128)}', space=vmem, size = 0x12000, scoped, tag = 'internal scratch']
  %s0 = inlined_call_operand.hbm [shape: f32[8,256], index: 0, kind: input, shape index: {}]
  %s1 = inlined_call_operand.hbm [shape: f32[8,256], index: 1, kind: input, shape index: {}]
  %s2 = inlined_call_operand.vmem [shape: f32[1,8,1], index: 2, kind: output, shape index: {0}]
  %s3 = inlined_call_operand.vmem [shape: f32[1,8,1], index: 3, kind: output, shape index: {1}]
  %s4 = inlined_call_operand.vmem [shape: f32[1,8,1], index: 4, kind: output, shape index: {2}]
  %5 = xla_tuple %s2, %s3, %s4
  %s6 = sld [smem:[#allocation0]]
  $region46: #{tpu_custom_call.1} parent=0
    _
  %s8 = ssub.s32 1, %s6
  %s9 = scalar_select 0, %s8, %s6
  $region1: #{tpu_custom_call.1} parent=0
    #allocation2 [shape = 'u8[8192]{0}', space=vmem, size = 0x2000, scoped, tag = 'input window, operand 0, single buffered']
    #allocation3 [shape = 's32[1]{0}', space=sflag, size = 0x4, scoped, tag = 'scoped memory for tpu_custom_call.1']
    #allocation4 [shape = 'u8[8192]{0}', space=vmem, size = 0x2000, scoped, tag = 'input window, operand 1, single buffered']
    #allocation5 [shape = 's32[1]{0}', space=sflag, size = 0x4, scoped, tag = 'scoped memory for tpu_custom_call.1']
    %10 = vsyncpa [#allocation3], 0
    %11 = vsyncpa [#allocation5], 0
    // Predicated region
    $region2: #{tpu_custom_call.1} parent=1 // pred_check
      _
    $region3: #{tpu_custom_call.1} parent=1 // pred_check_branch
      %13 = sbr.rel (0) target = $region5
    $region4: #{tpu_custom_call.1} parent=1 // pred_region
      %s15 = ssub.s32 256, 256
      %16 = vsyncadd [#allocation3], %s15
      %s18 = sshll.u32 [#allocation2], 4
      %s19 = int_to_ptr.vmem [resolvable:$true] %s18
      %21 = dma.hbm_to_vmem [thread:$0]  %s0, 256, %s19, [#allocation3]
    $region5: #{tpu_custom_call.1} parent=1 // pred_fallthru
      _
    // Predicated region
    $region6: #{tpu_custom_call.1} parent=1 // pred_check
      _
    $region7: #{tpu_custom_call.1} parent=1 // pred_check_branch
      %23 = sbr.rel (0) target = $region9
    $region8: #{tpu_custom_call.1} parent=1 // pred_region
      %s25 = ssub.s32 256, 256
      %26 = vsyncadd [#allocation5], %s25
      %s28 = sshll.u32 [#allocation4], 4
      %s29 = int_to_ptr.vmem [resolvable:$true] %s28
      %31 = dma.hbm_to_vmem [thread:$0]  %s1, 256, %s29, [#allocation5]
    $region9: #{tpu_custom_call.1} parent=1 // pred_fallthru
      _
    // Predicated region
    $region10: #{tpu_custom_call.1} parent=1 // pred_check
      _
    $region11: #{tpu_custom_call.1} parent=1 // pred_check_branch
      %33 = sbr.rel (0) target = $region13
    $region12: #{tpu_custom_call.1} parent=1 // pred_region
      %34 = dma.done [#allocation3], 256
    $region13: #{tpu_custom_call.1} parent=1 // pred_fallthru
      _
    // Predicated region
    $region14: #{tpu_custom_call.1} parent=1 // pred_check
      _
    $region15: #{tpu_custom_call.1} parent=1 // pred_check_branch
      %36 = sbr.rel (0) target = $region17
    $region16: #{tpu_custom_call.1} parent=1 // pred_region
      %37 = dma.done [#allocation5], 256
    $region17: #{tpu_custom_call.1} parent=1 // pred_fallthru
      _
    %p38 = scmp.eq.s32.totalorder 0, 0
    // Predicated region
    $region18: #{tpu_custom_call.1} parent=1 // pred_check
      %p39 = pneg %p38
    $region19: #{tpu_custom_call.1} parent=1 // pred_check_branch
      %41 = sbr.rel (%p39) target = $region21
    $region20: #{tpu_custom_call.1} parent=1 // pred_region
      %vm42 = vcmask 7168
      %43 = vst.msk [vmem:[%s2] sm:$0xff] %vm42, 0.0
      %44 = vst.msk [vmem:[%s3] sm:$0xff] %vm42, 0.0
      %45 = vst.msk [vmem:[%s4] sm:$0xff] %vm42, 0.0
    $region21: #{tpu_custom_call.1} parent=1 // pred_fallthru
      _
    %v46 = vld [vmem:[#allocation2] sm:$0xff]
    %v47 = vld [vmem:[#allocation2 + $0x8] sm:$0xff]
    %v48 = vld [vmem:[#allocation4] sm:$0xff]
    %v49 = vld [vmem:[#allocation4 + $0x8] sm:$0xff]
    %v50 = vlog2.pop %v46
    %v51 = vmul.f32 %v50, 0.6931472
    %v52 = vlog2.pop %v47
    %v53 = vmul.f32 %v52, 0.6931472
    %v54 = vmax.f32 %v51, -100.0
    %v55 = vmax.f32 %v53, -100.0
    %v56 = vsub.f32 0.0, %v46
    %v57 = vsub.f32 0.0, %v47
    %v58 = vadd.f32 %v56, 1.0
    %v59 = vlog2.pop %v58
    %v60 = vmul.f32 %v59, 0.6931472
    %v61 = vmul.f32 -0.5, %v56
    %v62 = vadd.f32 %v61, 1.0
    %v63 = vmul.f32 %v62, %v56
    %v64 = vand.u32 2147483647, %v56
    %vm65 = vcmp.lt.f32.partialorder %v64, 0.0004427343
    %v66 = vsel %vm65, %v63, %v60
    %v67 = vadd.f32 %v57, 1.0
    %v68 = vlog2.pop %v67
    %v69 = vmul.f32 %v68, 0.6931472
    %v70 = vmul.f32 -0.5, %v57
    %v71 = vadd.f32 %v70, 1.0
    %v72 = vmul.f32 %v71, %v57
    %v73 = vand.u32 2147483647, %v57
    %vm74 = vcmp.lt.f32.partialorder %v73, 0.0004427343
    %v75 = vsel %vm74, %v72, %v69
    %v76 = vmax.f32 %v66, -100.0
    %v77 = vmax.f32 %v75, -100.0
    %v78 = vsub.f32 %v54, %v76
    %v79 = vsub.f32 %v55, %v77
    %v80 = vmul.f32 %v48, %v78
    %v81 = vmul.f32 %v49, %v79
    %v82 = vadd.f32 %v76, %v80
    %v83 = vadd.f32 %v77, %v81
    %v84 = vround.ne.pseudo %v46
    %v85 = vround.ne.pseudo %v47
    %v86 = vmul.f32 %v84, %v48
    %v87 = vmul.f32 %v85, %v49
    %v88 = vadd.f32 %v84, %v48
    %v89 = vadd.f32 %v85, %v49
    %v90 = vld [vmem:[%s2] sm:$0xff]
    %v91 = vadd.f32 %v82, %v83
    %92 = vadd.xlane.f32.xlu0 %v91
    %v93 = vpop.xlane.xlu0 %92
    %v94 = vadd.f32 %v90, %v93
    %vm95 = vcmask 7168
    %96 = vst.msk [vmem:[%s2] sm:$0xff] %vm95, %v94
    %v97 = vld [vmem:[%s3] sm:$0xff]
    %v98 = vadd.f32 %v86, %v87
    %99 = vadd.xlane.f32.xlu0 %v98
    %v100 = vpop.xlane.xlu0 %99
    %v101 = vadd.f32 %v97, %v100
    %102 = vst.msk [vmem:[%s3] sm:$0xff] %vm95, %v101
    %v103 = vld [vmem:[%s4] sm:$0xff]
    %v104 = vadd.f32 %v88, %v89
    %105 = vadd.xlane.f32.xlu0 %v104
    %v106 = vpop.xlane.xlu0 %105
    %v107 = vadd.f32 %v103, %v106
    %108 = vst.msk [vmem:[%s4] sm:$0xff] %vm95, %v107
    // Predicated region
    $region22: #{tpu_custom_call.1} parent=1 // pred_check
      _
    $region23: #{tpu_custom_call.1} parent=1 // pred_check_branch
      %110 = sbr.rel (0) target = $region25
    $region24: #{tpu_custom_call.1} parent=1 // pred_region
      _
    $region25: #{tpu_custom_call.1} parent=1 // pred_fallthru
      _
    // Predicated region
    $region26: #{tpu_custom_call.1} parent=1 // pred_check
      _
    $region27: #{tpu_custom_call.1} parent=1 // pred_check_branch
      %112 = sbr.rel (0) target = $region29
    $region28: #{tpu_custom_call.1} parent=1 // pred_region
      _
    $region29: #{tpu_custom_call.1} parent=1 // pred_fallthru
      _
    // Predicated region
    $region30: #{tpu_custom_call.1} parent=1 // pred_check
      _
    $region31: #{tpu_custom_call.1} parent=1 // pred_check_branch
      %114 = sbr.rel (0) target = $region33
    $region32: #{tpu_custom_call.1} parent=1 // pred_region
      _
    $region33: #{tpu_custom_call.1} parent=1 // pred_fallthru
      _
    // Predicated region
    $region34: #{tpu_custom_call.1} parent=1 // pred_check
      _
    $region35: #{tpu_custom_call.1} parent=1 // pred_check_branch
      %116 = sbr.rel (0) target = $region37
    $region36: #{tpu_custom_call.1} parent=1 // pred_region
      _
    $region37: #{tpu_custom_call.1} parent=1 // pred_fallthru
      _
    // Predicated region
    $region38: #{tpu_custom_call.1} parent=1 // pred_check
      _
    $region39: #{tpu_custom_call.1} parent=1 // pred_check_branch
      %118 = sbr.rel (0) target = $region41
    $region40: #{tpu_custom_call.1} parent=1 // pred_region
      _
    $region41: #{tpu_custom_call.1} parent=1 // pred_fallthru
      _
    // Predicated region
    $region42: #{tpu_custom_call.1} parent=1 // pred_check
      _
    $region43: #{tpu_custom_call.1} parent=1 // pred_check_branch
      %120 = sbr.rel (0) target = $region45
    $region44: #{tpu_custom_call.1} parent=1 // pred_region
      _
    $region45: #{tpu_custom_call.1} parent=1 // pred_fallthru
      _
    %121 = vsyncpa [#allocation3], 1
    %122 = vsyncpa [#allocation5], 1

</llo_original>
